<compile_context>
chip_gen: v7x
topology: tpu7x:2x2x1
jax: 0.10.0
libtpu: 0.0.40
codegen_flags: <defaults>
</compile_context>

<pallas_src>
import numpy as np
import jax
import jax.numpy as jnp
from jax.experimental import pallas as pl
from jax.experimental.pallas import tpu as pltpu


def _pick_hw_tile(hw, cap=2048):
    """Largest lane-dense (multiple-of-128) tile <= cap that divides hw."""
    if hw % 128 != 0:
        return hw                      # fall back to a single full-HW block
    t = 128
    while t * 2 <= min(hw, cap) and hw % (t * 2) == 0:
        t *= 2
    return t


def se_layer(x, w1, w2, *, hw_tile=None):
    """SELayer forward.  x: (B, C, H, W); w1: (C//r, C); w2: (C, C//r)."""
    b, c, h, w = x.shape
    hw = h * w
    mid = w1.shape[0]
    x3 = x.reshape(b, c, hw)           # contiguous minor-dim merge, no relayout

    if hw_tile is None:
        hw_tile = _pick_hw_tile(hw)
    assert hw % hw_tile == 0
    num_t = hw // hw_tile
    inv_hw = 1.0 / float(hw)

    # ---- pass 1: squeeze (global avg pool) + excite (fc -> relu -> fc -> sigmoid) ----
    def squeeze_excite_kernel(x_ref, w1_ref, w2_ref, y_ref, acc_ref):
        t = pl.program_id(1)

        @pl.when(t == 0)
        def _():
            acc_ref[...] = jnp.zeros_like(acc_ref)

        # lane (XLU) reduce of the (C, hw_tile) block -> per-channel partial sum
        acc_ref[...] += jnp.sum(x_ref[0], axis=1, keepdims=True)

        @pl.when(t == pl.num_programs(1) - 1)
        def _():
            mean = acc_ref[...] * inv_hw                                   # (C, 1)
            hid = jnp.maximum(
                jnp.dot(w1_ref[...], mean, preferred_element_type=jnp.float32),
                0.0)                                                       # (mid, 1)
            z = jnp.dot(w2_ref[...], hid, preferred_element_type=jnp.float32)
            y_ref[0] = 1.0 / (1.0 + jnp.exp(-z))                           # sigmoid

    gate = pl.pallas_call(
        squeeze_excite_kernel,
        out_shape=jax.ShapeDtypeStruct((b, c, 1), jnp.float32),
        grid=(b, num_t),
        in_specs=[
            pl.BlockSpec((1, c, hw_tile), lambda i, t: (i, 0, t)),
            pl.BlockSpec((mid, c), lambda i, t: (0, 0)),
            pl.BlockSpec((c, mid), lambda i, t: (0, 0)),
        ],
        out_specs=pl.BlockSpec((1, c, 1), lambda i, t: (i, 0, 0)),
        scratch_shapes=[pltpu.VMEM((c, 1), jnp.float32)],
        compiler_params=pltpu.CompilerParams(
            dimension_semantics=("parallel", "arbitrary")),
    )(x3, w1, w2)

    # ---- pass 2: broadcast-scale x by the per-(b, c) gate ----
    def scale_kernel(x_ref, g_ref, o_ref):
        o_ref[0] = x_ref[0] * g_ref[0]          # (C, hw_tile) * (C, 1)

    out = pl.pallas_call(
        scale_kernel,
        out_shape=jax.ShapeDtypeStruct((b, c, hw), jnp.float32),
        grid=(b, num_t),
        in_specs=[
            pl.BlockSpec((1, c, hw_tile), lambda i, t: (i, 0, t)),
            pl.BlockSpec((1, c, 1), lambda i, t: (i, 0, 0)),
        ],
        out_specs=pl.BlockSpec((1, c, hw_tile), lambda i, t: (i, 0, t)),
        compiler_params=pltpu.CompilerParams(
            dimension_semantics=("parallel", "parallel")),
    )(x3, gate)

    return out.reshape(b, c, h, w)


# ---------------- pure-JAX reference (mirrors the PyTorch SELayer) ----------------

def reference(x, w1, w2):
    y = x.mean(axis=(2, 3))                      # AdaptiveAvgPool2d(1) + view
    y = jnp.maximum(y @ w1.T, 0.0)               # Linear(C, C//r, bias=False) + ReLU
    y = jax.nn.sigmoid(y @ w2.T)                 # Linear(C//r, C, bias=False) + Sigmoid
    return x * y[:, :, None, None]               # x * y.expand_as(x)


if __name__ == "__main__":
    batch, channels, hgt, wid = 2, 32, 16, 16
    reduction = 16
    mid = channels // reduction                  # 2

    keys = jax.random.split(jax.random.PRNGKey(0), 3)
    x = jax.random.normal(keys[0], (batch, channels, hgt, wid), jnp.float32)
    w1 = 0.3 * jax.random.normal(keys[1], (mid, channels), jnp.float32)
    w2 = 0.3 * jax.random.normal(keys[2], (channels, mid), jnp.float32)

    ref = reference(x, w1, w2)

    # default tile (single full-HW block at this size)
    out = jax.block_until_ready(se_layer(x, w1, w2))
    np.testing.assert_allclose(np.asarray(out), np.asarray(ref), rtol=1e-5, atol=1e-5)

    # forced 128-lane tiling to exercise the multi-tile accumulation path
    out_tiled = jax.block_until_ready(se_layer(x, w1, w2, hw_tile=128))
    np.testing.assert_allclose(np.asarray(out_tiled), np.asarray(ref), rtol=1e-5, atol=1e-5)

    assert out.shape == (batch, channels, hgt, wid)
    print("KERNEL_OK")
</pallas_src>

<mosaic_0001>
module attributes {stable_mosaic.version = 11 : i64} {
  func.func @squeeze_excite_kernel(%arg0: i32, %arg1: i32, %arg2: memref<1x32x256xf32, #tpu.memory_space<vmem>>, %arg3: memref<2x32xf32, #tpu.memory_space<vmem>>, %arg4: memref<32x2xf32, #tpu.memory_space<vmem>>, %arg5: memref<1x32x1xf32, #tpu.memory_space<vmem>>, %arg6: memref<32x1xf32, #tpu.memory_space<vmem>>) attributes {dimension_semantics = [#tpu.dimension_semantics<parallel>, #tpu.dimension_semantics<arbitrary>], iteration_bounds = array<i64: 2, 1>, scalar_prefetch = 0 : i64, scratch_operands = 1 : i64, tpu.core_type = #tpu.core_type<tc>, window_params = [{transform_indices = @transform_0, window_bounds = array<i64: 1, 32, 256>}, {pipeline_mode = #tpu.pipeline_mode<synchronous>, transform_indices = @transform_1, window_bounds = array<i64: 2, 32>}, {pipeline_mode = #tpu.pipeline_mode<synchronous>, transform_indices = @transform_2, window_bounds = array<i64: 32, 2>}, {transform_indices = @transform_3, window_bounds = array<i64: 1, 32, 1>}]} {
    %c0_i32 = arith.constant 0 : i32
    %0 = arith.cmpi eq, %arg1, %c0_i32 : i32
    %1 = arith.extui %0 : i1 to i32
    %c0_i32_0 = arith.constant 0 : i32
    %2 = arith.cmpi ne, %1, %c0_i32_0 : i32
    scf.if %2 {
      %cst_9 = arith.constant 0.000000e+00 : f32
      %13 = vector.broadcast %cst_9 : f32 to vector<32x1xf32>
      %c0_10 = arith.constant 0 : index
      %c0_11 = arith.constant 0 : index
      %14 = vector.load %arg6[%c0_10, %c0_11] : memref<32x1xf32, #tpu.memory_space<vmem>>, vector<32x1xf32>
      tpu.vector_store %arg6[%c0_10, %c0_11], %13 {strides = array<i32>} : memref<32x1xf32, #tpu.memory_space<vmem>>, vector<32x1xf32>,
    } else {
    }
    %c0 = arith.constant 0 : index
    %c0_1 = arith.constant 0 : index
    %3 = vector.load %arg6[%c0, %c0_1] : memref<32x1xf32, #tpu.memory_space<vmem>>, vector<32x1xf32>
    %c0_2 = arith.constant 0 : index
    %c0_3 = arith.constant 0 : index
    %c0_4 = arith.constant 0 : index
    %4 = vector.load %arg2[%c0_2, %c0_3, %c0_4] : memref<1x32x256xf32, #tpu.memory_space<vmem>>, vector<1x32x256xf32>
    %5 = vector.shape_cast %4 : vector<1x32x256xf32> to vector<32x256xf32>
    %cst = arith.constant dense<0.000000e+00> : vector<32xf32>
    %6 = vector.multi_reduction <add>, %5, %cst [1] : vector<32x256xf32> to vector<32xf32>
    %7 = vector.shape_cast %6 : vector<32xf32> to vector<32x1xf32>
    %8 = arith.addf %3, %7 : vector<32x1xf32>
    %c0_5 = arith.constant 0 : index
    %c0_6 = arith.constant 0 : index
    %9 = vector.load %arg6[%c0_5, %c0_6] : memref<32x1xf32, #tpu.memory_space<vmem>>, vector<32x1xf32>
    tpu.vector_store %arg6[%c0_5, %c0_6], %8 {strides = array<i32>} : memref<32x1xf32, #tpu.memory_space<vmem>>, vector<32x1xf32>,
    %c0_i32_7 = arith.constant 0 : i32
    %10 = arith.cmpi eq, %arg1, %c0_i32_7 : i32
    %11 = arith.extui %10 : i1 to i32
    %c0_i32_8 = arith.constant 0 : i32
    %12 = arith.cmpi ne, %11, %c0_i32_8 : i32
    scf.if %12 {
      %c0_9 = arith.constant 0 : index
      %c0_10 = arith.constant 0 : index
      %13 = vector.load %arg6[%c0_9, %c0_10] : memref<32x1xf32, #tpu.memory_space<vmem>>, vector<32x1xf32>
      %cst_11 = arith.constant 3.906250e-03 : f32
      %14 = vector.broadcast %cst_11 : f32 to vector<32x1xf32>
      %15 = arith.mulf %13, %14 : vector<32x1xf32>
      %c0_12 = arith.constant 0 : index
      %c0_13 = arith.constant 0 : index
      %16 = vector.load %arg3[%c0_12, %c0_13] : memref<2x32xf32, #tpu.memory_space<vmem>>, vector<2x32xf32>
      %cst_14 = arith.constant dense<0.000000e+00> : vector<2x1xf32>
      %17 = tpu.matmul %16, %15, %cst_14 {dimension_numbers = #tpu.dot_dimension_numbers<[1], [0], [0], [1], [0, 0, 1, 1], [], []>} : vector<2x32xf32>, vector<32x1xf32>, vector<2x1xf32> -> vector<2x1xf32>
      %cst_15 = arith.constant 0.000000e+00 : f32
      %18 = vector.broadcast %cst_15 : f32 to vector<2x1xf32>
      %19 = arith.maximumf %17, %18 : vector<2x1xf32>
      %c0_16 = arith.constant 0 : index
      %c0_17 = arith.constant 0 : index
      %20 = vector.load %arg4[%c0_16, %c0_17] : memref<32x2xf32, #tpu.memory_space<vmem>>, vector<32x2xf32>
      %cst_18 = arith.constant dense<0.000000e+00> : vector<32x1xf32>
      %21 = tpu.matmul %20, %19, %cst_18 {dimension_numbers = #tpu.dot_dimension_numbers<[1], [0], [0], [1], [0, 0, 1, 1], [], []>} : vector<32x2xf32>, vector<2x1xf32>, vector<32x1xf32> -> vector<32x1xf32>
      %cst_19 = arith.constant 0.000000e+00 : f32
      %22 = vector.broadcast %cst_19 : f32 to vector<32x1xf32>
      %23 = arith.subf %22, %21 : vector<32x1xf32>
      %24 = math.exp %23 : vector<32x1xf32>
      %cst_20 = arith.constant 1.000000e+00 : f32
      %25 = vector.broadcast %cst_20 : f32 to vector<32x1xf32>
      %26 = arith.addf %25, %24 : vector<32x1xf32>
      %cst_21 = arith.constant 1.000000e+00 : f32
      %27 = vector.broadcast %cst_21 : f32 to vector<32x1xf32>
      %28 = arith.divf %27, %26 : vector<32x1xf32>
      %c0_22 = arith.constant 0 : index
      %c0_23 = arith.constant 0 : index
      %c0_24 = arith.constant 0 : index
      %29 = vector.load %arg5[%c0_22, %c0_23, %c0_24] : memref<1x32x1xf32, #tpu.memory_space<vmem>>, vector<1x32x1xf32>
      %30 = vector.shape_cast %29 : vector<1x32x1xf32> to vector<32x1xf32>
      %31 = vector.shape_cast %28 : vector<32x1xf32> to vector<1x32x1xf32>
      tpu.vector_store %arg5[%c0_22, %c0_23, %c0_24], %31 {strides = array<i32>} : memref<1x32x1xf32, #tpu.memory_space<vmem>>, vector<1x32x1xf32>,
    } else {
    }
    return
  }
  func.func @transform_0(%arg0: i32, %arg1: i32) -> (i32, i32, i32) {
    %c0_i32 = arith.constant 0 : i32
    %c0_i32_0 = arith.constant 0 : i32
    return %arg0, %c0_i32, %arg1 : i32, i32, i32
  }
  func.func @transform_1(%arg0: i32, %arg1: i32) -> (i32, i32) {
    %c0_i32 = arith.constant 0 : i32
    %c0_i32_0 = arith.constant 0 : i32
    %c0_i32_1 = arith.constant 0 : i32
    return %c0_i32, %c0_i32_0 : i32, i32
  }
  func.func @transform_2(%arg0: i32, %arg1: i32) -> (i32, i32) {
    %c0_i32 = arith.constant 0 : i32
    %c0_i32_0 = arith.constant 0 : i32
    %c0_i32_1 = arith.constant 0 : i32
    return %c0_i32, %c0_i32_0 : i32, i32
  }
  func.func @transform_3(%arg0: i32, %arg1: i32) -> (i32, i32, i32) {
    %c0_i32 = arith.constant 0 : i32
    %c0_i32_0 = arith.constant 0 : i32
    %c0_i32_1 = arith.constant 0 : i32
    return %arg0, %c0_i32, %c0_i32_0 : i32, i32, i32
  }
}

</mosaic_0001>

<llo_original>
// kernel: tpu_custom_call.1
$region0: #{tpu_custom_call.1}
  #allocation0 [shape = 'u32[]', space=smem, size = 0x4, offset = 0x4, fixed_abs, tag = 'smem constant byte address 0x4 - core index']
  #allocation1 [shape = 'u32[144,128]{1,0:T(1,128)}', space=vmem, size = 0x12000, scoped, tag = 'internal scratch']
  #allocation2 [shape = 'f32[32,1]{1,0:T(8,128)}', space=vmem, size = 0x4000, scoped, tag = 'scratch operand']
  %s0 = inlined_call_operand.hbm [shape: f32[2,32,256], index: 0, kind: input, shape index: {}]
  %s1 = inlined_call_operand.vmem [shape: f32[2,32], index: 1, kind: input, shape index: {}]
  %s2 = inlined_call_operand.vmem [shape: f32[32,2], index: 2, kind: input, shape index: {}]
  %s3 = inlined_call_operand.vmem [shape: f32[2,32,1], index: 3, kind: output, shape index: {}]
  %s4 = sld [smem:[#allocation0]]
  $region57: #{tpu_custom_call.1} parent=0
    _
  %s6 = ssub.s32 1, %s4
  %s7 = scalar_select 0, %s6, %s4
  $region1: #{tpu_custom_call.1} parent=0
    #allocation3 [shape = 'u8[65536]{0}', space=vmem, size = 0x10000, scoped, tag = 'input window, operand 0']
    #allocation4 [shape = 's32[2]{0}', space=sflag, size = 0x8, scoped, tag = 'scoped memory for tpu_custom_call.1']
    %8 = vsyncpa [#allocation4], 0
    %s9 = scalar_lea.sflag [#allocation4], 1
    %10 = vsyncpa %s9, 0
    loop: start=0, step=1, limit=4
    $region2: #{tpu_custom_call.1} parent=1 // loop_pre_header
      _
    $region3: #{tpu_custom_call.1} parent=1 // loop_header
      %s12 = sphi 0, %s16
      %p13 = scmp.ge.s32.totalorder %s12, 4
      %s19 = sphi 0, %s31
      %s20 = sphi 0, %s27
      %s21 = sphi 0, %s19
      %s22 = sphi 0, %s20
      %s23 = sphi 0, %s21
      %s24 = sphi 0, %s22
      %s36 = sphi 0, %s38
      %s39 = sphi 0, %s36
      %s40 = sphi 0, %s39
      %s56 = sphi 0, %s40
      %s60 = sphi 0, %s60
      %s62 = sphi 0, %s60
      %s63 = sphi 0, %s62
      %s77 = sphi 0, %s63
      %s81 = sphi 0, %s81
      %s83 = sphi 0, %s81
      %s84 = sphi 0, %s83
      %s98 = sphi 0, %s84
      %s104 = sphi 0, %s106
      %s107 = sphi 0, %s104
      %s108 = sphi 0, %s107
      %s124 = sphi 0, %s108
    $region4: #{tpu_custom_call.1} parent=1 // loop_header_branch
      %15 = sbr.rel (%p13) target = $region8
    $region5: #{tpu_custom_call.1} parent=1 // loop_body
      %s17 = ssub.s32 %s12, 1
      %s18 = ssub.s32 %s12, 2
      %s25 = sadd.s32 1, %s20
      %p26 = scmp.ge.s32.totalorder %s25, 1
      %s27 = scalar_select %p26, 0, %s25
      %s28 = sadd.s32 1, %s19
      %s29 = scalar_select %p26, %s28, %s19
      %p30 = scmp.ge.s32.totalorder %s29, 2
      %s31 = scalar_select %p30, 0, %s29
      %s32 = ssub.s32 %s19, %s31
      %s33 = ssub.s32 %s20, %s27
      %s34 = sor.u32 %s32, %s33
      %p35 = scmp.eq.s32.totalorder %s34, 0
      %s37 = sadd.s32 %s36, 1
      %s38 = scalar_select %p35, %s36, %s37
      %p41 = pneg %p35
      %p42 = scmp.eq.s32.totalorder %s12, 1
      %p43 = por %p41, %p42
      %p44 = scmp.ne.s32.totalorder %s36, %s39
      %p45 = scmp.eq.s32.totalorder %s12, 0
      %p46 = por %p44, %p45
      %p47 = scmp.ne.s32.totalorder %s36, %s39
      %p48 = scmp.eq.s32.totalorder %s17, 1
      %p49 = por %p47, %p48
      %p50 = scmp.ne.s32.totalorder %s39, %s40
      %p51 = scmp.eq.s32.totalorder %s17, 0
      %p52 = por %p50, %p51
      %p53 = scmp.ne.s32.totalorder %s39, %s40
      %p54 = scmp.eq.s32.totalorder %s18, 1
      %p55 = por %p53, %p54
      %p57 = scmp.ne.s32.totalorder %s40, %s56
      %p58 = scmp.eq.s32.totalorder %s18, 0
      %p59 = por %p57, %p58
      %s61 = sadd.s32 %s60, 1
      %p64 = scmp.eq.s32.totalorder %s12, 1
      %p65 = scmp.ne.s32.totalorder %s60, %s62
      %p66 = scmp.eq.s32.totalorder %s12, 0
      %p67 = por %p65, %p66
      %p68 = scmp.ne.s32.totalorder %s60, %s62
      %p69 = scmp.eq.s32.totalorder %s17, 1
      %p70 = por %p68, %p69
      %p71 = scmp.ne.s32.totalorder %s62, %s63
      %p72 = scmp.eq.s32.totalorder %s17, 0
      %p73 = por %p71, %p72
      %p74 = scmp.ne.s32.totalorder %s62, %s63
      %p75 = scmp.eq.s32.totalorder %s18, 1
      %p76 = por %p74, %p75
      %p78 = scmp.ne.s32.totalorder %s63, %s77
      %p79 = scmp.eq.s32.totalorder %s18, 0
      %p80 = por %p78, %p79
      %s82 = sadd.s32 %s81, 1
      %p85 = scmp.eq.s32.totalorder %s12, 1
      %p86 = scmp.ne.s32.totalorder %s81, %s83
      %p87 = scmp.eq.s32.totalorder %s12, 0
      %p88 = por %p86, %p87
      %p89 = scmp.ne.s32.totalorder %s81, %s83
      %p90 = scmp.eq.s32.totalorder %s17, 1
      %p91 = por %p89, %p90
      %p92 = scmp.ne.s32.totalorder %s83, %s84
      %p93 = scmp.eq.s32.totalorder %s17, 0
      %p94 = por %p92, %p93
      %p95 = scmp.ne.s32.totalorder %s83, %s84
      %p96 = scmp.eq.s32.totalorder %s18, 1
      %p97 = por %p95, %p96
      %p99 = scmp.ne.s32.totalorder %s84, %s98
      %p100 = scmp.eq.s32.totalorder %s18, 0
      %p101 = por %p99, %p100
      %s102 = ssub.s32 %s19, %s31
      %p103 = scmp.eq.s32.totalorder %s102, 0
      %s105 = sadd.s32 %s104, 1
      %s106 = scalar_select %p103, %s104, %s105
      %p109 = pneg %p103
      %p110 = scmp.eq.s32.totalorder %s12, 1
      %p111 = por %p109, %p110
      %p112 = scmp.ne.s32.totalorder %s104, %s107
      %p113 = scmp.eq.s32.totalorder %s12, 0
      %p114 = por %p112, %p113
      %p115 = scmp.ne.s32.totalorder %s104, %s107
      %p116 = scmp.eq.s32.totalorder %s17, 1
      %p117 = por %p115, %p116
      %p118 = scmp.ne.s32.totalorder %s107, %s108
      %p119 = scmp.eq.s32.totalorder %s17, 0
      %p120 = por %p118, %p119
      %p121 = scmp.ne.s32.totalorder %s107, %s108
      %p122 = scmp.eq.s32.totalorder %s18, 1
      %p123 = por %p121, %p122
      %p125 = scmp.ne.s32.totalorder %s108, %s124
      %p126 = scmp.eq.s32.totalorder %s18, 0
      %p127 = por %p125, %p126
      %p128 = scmp.le.s32.totalorder 1, %s12
      %p129 = scmp.lt.s32.totalorder %s12, 3
      %p130 = pnand %p128, %p129
      %p131 = pneg %p130
      // Predicated region
      $region9: #{tpu_custom_call.1} parent=5 // pred_check
        _
      $region10: #{tpu_custom_call.1} parent=5 // pred_check_branch
        %133 = sbr.rel (%p130) target = $region12
      $region11: #{tpu_custom_call.1} parent=5 // pred_region
        %s134 = ssub.s32 %s12, 1
        // Predicated region
        $region13: #{tpu_custom_call.1} parent=11 // pred_check
          %p135 = pneg %p73
        $region14: #{tpu_custom_call.1} parent=11 // pred_check_branch
          %137 = sbr.rel (%p135) target = $region16
        $region15: #{tpu_custom_call.1} parent=11 // pred_region
          _
        $region16: #{tpu_custom_call.1} parent=11 // pred_fallthru
          _
        // Predicated region
        $region17: #{tpu_custom_call.1} parent=11 // pred_check
          %p138 = pneg %p94
        $region18: #{tpu_custom_call.1} parent=11 // pred_check_branch
          %140 = sbr.rel (%p138) target = $region20
        $region19: #{tpu_custom_call.1} parent=11 // pred_region
          _
        $region20: #{tpu_custom_call.1} parent=11 // pred_fallthru
          _
      $region12: #{tpu_custom_call.1} parent=5 // pred_fallthru
        _
      %p141 = scmp.lt.s32.totalorder %s12, 2
      // Predicated region
      $region21: #{tpu_custom_call.1} parent=5 // pred_check
        %p142 = pneg %p141
      $region22: #{tpu_custom_call.1} parent=5 // pred_check_branch
        %144 = sbr.rel (%p142) target = $region24
      $region23: #{tpu_custom_call.1} parent=5 // pred_region
        // Predicated region
        $region25: #{tpu_custom_call.1} parent=23 // pred_check
          %p145 = pneg %p46
        $region26: #{tpu_custom_call.1} parent=23 // pred_check_branch
          %147 = sbr.rel (%p145) target = $region28
        $region27: #{tpu_custom_call.1} parent=23 // pred_region
          %s148 = sand.u32 %s36, 1
          %s149 = scalar_lea.sflag [#allocation4], %s148
          %s150 = sand.u32 %s36, 1
          %s151 = smul.addr %s150, 64
          %s152 = scalar_lea.vmem [#allocation3], %s151
          %s153 = smul.u32 2, %s20
          %s155 = ssub.s32 1024, 1024
          %156 = vsyncadd %s149, %s155
          %s157 = smul.addr %s19, 8
          %s158 = sadd.s32 %s153, %s157
          %s159 = smul.addr %s158, 128
          %s160 = scalar_lea.hbm %s0, %s159
          %s161 = sshll.u32 %s152, 4
          %s162 = int_to_ptr.vmem [resolvable:$true] %s161
          %167 = dma.hbm_to_vmem [thread:$0]  %s160, 1024, %s162, %s149, 256, 256, 16
        $region28: #{tpu_custom_call.1} parent=23 // pred_fallthru
          _
      $region24: #{tpu_custom_call.1} parent=5 // pred_fallthru
        _
      %p168 = scmp.le.s32.totalorder 1, %s12
      %p169 = scmp.lt.s32.totalorder %s12, 3
      %p170 = pnand %p168, %p169
      %p171 = pneg %p170
      // Predicated region
      $region29: #{tpu_custom_call.1} parent=5 // pred_check
        _
      $region30: #{tpu_custom_call.1} parent=5 // pred_check_branch
        %173 = sbr.rel (%p170) target = $region32
      $region31: #{tpu_custom_call.1} parent=5 // pred_region
        %s174 = ssub.s32 %s12, 1
        %s175 = sand.u32 %s39, 1
        %s176 = scalar_lea.sflag [#allocation4], %s175
        %s177 = sand.u32 %s39, 1
        %s178 = smul.addr %s177, 64
        %s179 = scalar_lea.vmem [#allocation3], %s178
        // Predicated region
        $region33: #{tpu_custom_call.1} parent=31 // pred_check
          %p180 = pneg %p52
        $region34: #{tpu_custom_call.1} parent=31 // pred_check_branch
          %182 = sbr.rel (%p180) target = $region36
        $region35: #{tpu_custom_call.1} parent=31 // pred_region
          %183 = dma.done %s176, 1024
        $region36: #{tpu_custom_call.1} parent=31 // pred_fallthru
          _
        %s184 = sand.u32 %s39, 1
        %s185 = scalar_lea.sflag [#allocation4], %s184
        %s186 = sand.u32 %s39, 1
        %s187 = smul.addr %s186, 64
        %s188 = scalar_lea.vmem [#allocation3], %s187
        %p189 = pneg %p52
        %p190 = pneg %p49
        %p191 = pneg %p73
        %p192 = pneg %p70
        %p193 = pneg %p94
        %p194 = pneg %p91
        %p195 = pneg %p120
        %p196 = pneg %p117
        %p197 = scmp.lt.s32.totalorder %s21, 1
        %s198 = scalar_select %p197, %s21, 1
        %s199 = smul.addr %s198, 4
        %s200 = smul.addr %s199, 8
        %s201 = scalar_lea.vmem %s3, %s200
        %s202 = smul.u32 2, %s22
        %p203 = scmp.lt.s32.totalorder %s21, 1
        %s204 = scalar_select %p203, %s21, 1
        %s205 = smul.addr %s204, 4
        %s206 = smul.addr %s205, 8
        %s207 = scalar_lea.vmem %s3, %s206
        %p208 = scmp.eq.s32.totalorder %s22, 0
        // Predicated region
        $region37: #{tpu_custom_call.1} parent=31 // pred_check
          %p209 = pneg %p208
        $region38: #{tpu_custom_call.1} parent=31 // pred_check_branch
          %211 = sbr.rel (%p209) target = $region40
        $region39: #{tpu_custom_call.1} parent=31 // pred_region
          %vm212 = vcmask 7168
          %213 = vst.msk [vmem:[#allocation2] sm:$0xff] %vm212, 0.0
          %214 = vst.msk [vmem:[#allocation2 + $0x8] sm:$0xff] %vm212, 0.0
          %215 = vst.msk [vmem:[#allocation2 + $0x10] sm:$0xff] %vm212, 0.0
          %216 = vst.msk [vmem:[#allocation2 + $0x18] sm:$0xff] %vm212, 0.0
        $region40: #{tpu_custom_call.1} parent=31 // pred_fallthru
          _
        %v217 = vld [vmem:[#allocation2] sm:$0xff]
        %v218 = vld [vmem:[#allocation2 + $0x8] sm:$0xff]
        %v219 = vld [vmem:[#allocation2 + $0x10] sm:$0xff]
        %v220 = vld [vmem:[#allocation2 + $0x18] sm:$0xff]
        %v221 = vld [vmem:[%s179] sm:$0xff]
        %v222 = vld [vmem:[%s179 + $0x8] sm:$0xff]
        %v223 = vld [vmem:[%s179 + $0x10] sm:$0xff]
        %v224 = vld [vmem:[%s179 + $0x18] sm:$0xff]
        %v225 = vld [vmem:[%s179 + $0x20] sm:$0xff]
        %v226 = vld [vmem:[%s179 + $0x28] sm:$0xff]
        %v227 = vld [vmem:[%s179 + $0x30] sm:$0xff]
        %v228 = vld [vmem:[%s179 + $0x38] sm:$0xff]
        %v229 = vadd.f32 %v221, %v222
        %230 = vadd.xlane.f32.xlu0 %v229
        %v231 = vpop.xlane.xlu0 %230
        %v232 = vadd.f32 %v223, %v224
        %233 = vadd.xlane.f32.xlu0 %v232
        %v234 = vpop.xlane.xlu0 %233
        %v235 = vadd.f32 %v225, %v226
        %236 = vadd.xlane.f32.xlu0 %v235
        %v237 = vpop.xlane.xlu0 %236
        %v238 = vadd.f32 %v227, %v228
        %239 = vadd.xlane.f32.xlu0 %v238
        %v240 = vpop.xlane.xlu0 %239
        %v241 = vadd.f32 %v217, %v231
        %v242 = vadd.f32 %v218, %v234
        %v243 = vadd.f32 %v219, %v237
        %v244 = vadd.f32 %v220, %v240
        %vm245 = vcmask 7168
        %246 = vst.msk [vmem:[#allocation2] sm:$0xff] %vm245, %v241
        %247 = vst.msk [vmem:[#allocation2 + $0x8] sm:$0xff] %vm245, %v242
        %248 = vst.msk [vmem:[#allocation2 + $0x10] sm:$0xff] %vm245, %v243
        %249 = vst.msk [vmem:[#allocation2 + $0x18] sm:$0xff] %vm245, %v244
        // Predicated region
        $region41: #{tpu_custom_call.1} parent=31 // pred_check
          %p250 = pneg %p208
        $region42: #{tpu_custom_call.1} parent=31 // pred_check_branch
          %252 = sbr.rel (%p250) target = $region44
        $region43: #{tpu_custom_call.1} parent=31 // pred_region
          %v253 = vld [vmem:[#allocation2] sm:$0xff]
          %v254 = vld [vmem:[#allocation2 + $0x8] sm:$0xff]
          %v255 = vld [vmem:[#allocation2 + $0x10] sm:$0xff]
          %v256 = vld [vmem:[#allocation2 + $0x18] sm:$0xff]
          %v257 = vmul.f32 %v253, 0.00390625
          %v258 = vmul.f32 %v254, 0.00390625
          %v259 = vmul.f32 %v255, 0.00390625
          %v260 = vmul.f32 %v256, 0.00390625
          %v261 = vld [vmem:[%s1] sm:$0x3]
          %vm262 = vcmask 261120
          %v264 = vsel %vm262, %v261, 0
          %266 = vmatprep.subr.mxu0 0.0
          %267 = vmatpush1.msra.mxu0 %v257
          %268 = vmatprep.subr.mxu0 0.0
          %269 = vmatpush1.msra.mxu0 %v258
          %270 = vmatprep.subr.mxu0 0.0
          %271 = vmatpush1.msra.mxu0 %v259
          %272 = vmatprep.subr.mxu0 0.0
          %273 = vmatpush1.msra.mxu0 %v260
          %274 = vmatprep.subr.mxu0 0.0
          %275 = vmatpush1.msra.mxu0 0.0
          %276 = vmatprep.subr.mxu0 0.0
          %277 = vmatpush1.msra.mxu0 0.0
          %278 = vmatprep.subr.mxu0 0.0
          %279 = vmatpush1.msra.mxu0 0.0
          %280 = vmatprep.subr.mxu0 0.0
          %281 = vmatpush1.msra.mxu0 0.0
          %282 = vmatprep.subr.mxu0 0.0
          %283 = vmatpush1.msra.mxu0 0.0
          %284 = vmatprep.subr.mxu0 0.0
          %285 = vmatpush1.msra.mxu0 0.0
          %286 = vmatprep.subr.mxu0 0.0
          %287 = vmatpush1.msra.mxu0 0.0
          %288 = vmatprep.subr.mxu0 0.0
          %289 = vmatpush1.msra.mxu0 0.0
          %290 = vmatprep.subr.mxu0 0.0
          %291 = vmatpush1.msra.mxu0 0.0
          %292 = vmatprep.subr.mxu0 0.0
          %293 = vmatpush1.msra.mxu0 0.0
          %294 = vmatprep.subr.mxu0 0.0
          %295 = vmatpush1.msra.mxu0 0.0
          %296 = vmatprep.subr.mxu0 0.0
          %297 = vmatpush1.msra.mxu0 0.0
          %298 = vmatprep.subr.mxu0 0.0
          %299 = vmatpush1.msra.mxu0 0.0
          %300 = vmatprep.subr.mxu0 0.0
          %301 = vmatpush1.msra.mxu0 0.0
          %302 = vmatprep.subr.mxu0 0.0
          %303 = vmatpush1.msra.mxu0 0.0
          %304 = vmatprep.subr.mxu0 0.0
          %305 = vmatpush1.msra.mxu0 0.0
          %306 = vmatprep.subr.mxu0 0.0
          %307 = vmatpush1.msra.mxu0 0.0
          %308 = vmatprep.subr.mxu0 0.0
          %309 = vmatpush1.msra.mxu0 0.0
          %310 = vmatprep.subr.mxu0 0.0
          %311 = vmatpush1.msra.mxu0 0.0
          %312 = vmatprep.subr.mxu0 0.0
          %313 = vmatpush1.msra.mxu0 0.0
          %314 = vmatprep.subr.mxu0 0.0
          %315 = vmatpush1.msra.mxu0 0.0
          %316 = vmatprep.subr.mxu0 0.0
          %317 = vmatpush1.msra.mxu0 0.0
          %318 = vmatprep.subr.mxu0 0.0
          %319 = vmatpush1.msra.mxu0 0.0
          %320 = vmatprep.subr.mxu0 0.0
          %321 = vmatpush1.msra.mxu0 0.0
          %322 = vmatprep.subr.mxu0 0.0
          %323 = vmatpush1.msra.mxu0 0.0
          %324 = vmatprep.subr.mxu0 0.0
          %325 = vmatpush1.msra.mxu0 0.0
          %326 = vmatprep.subr.mxu0 0.0
          %327 = vmatpush1.msra.mxu0 0.0
          %328 = vmatprep.subr.mxu0 0.0
          %329 = vmatpush1.msra.mxu0 0.0
          %330 = vmatprep.mubr.f32.mxu0 0.0
          %331 = vmatmul.mubr.f32.gmra.mrb[0].mxu0 %v264
          %v332 = vpop.f32.mrb[0].mxu0
          %v333 = vadd.f32 0.0, %v332
          %v334 = vpop.f32.mrb[0].mxu0
          %335 = vdwg.mxu0
          %v336 = vmax.f32 %v333, 0.0
          %v337 = vld [vmem:[%s2] sm:$0xff]
          %v338 = vld [vmem:[%s2 + $0x8] sm:$0xff]
          %v339 = vld [vmem:[%s2 + $0x10] sm:$0xff]
          %v340 = vld [vmem:[%s2 + $0x18] sm:$0xff]
          %vm341 = vcmask 15360
          %v343 = vsel %vm341, %v337, 0
          %v346 = vsel %vm341, %v338, 0
          %v349 = vsel %vm341, %v339, 0
          %v352 = vsel %vm341, %v340, 0
          %vm354 = vcmask 1041408
          %v356 = vsel %vm354, %v336, 0
          %358 = vmatprep.subr.mxu0 0.0
          %359 = vmatpush1.msra.mxu0 %v356
          %360 = vmatprep.subr.mxu0 0.0
          %361 = vmatpush1.msra.mxu0 0.0
          %362 = vmatprep.subr.mxu0 0.0
          %363 = vmatpush1.msra.mxu0 0.0
          %364 = vmatprep.subr.mxu0 0.0
          %365 = vmatpush1.msra.mxu0 0.0
          %366 = vmatprep.subr.mxu0 0.0
          %367 = vmatpush1.msra.mxu0 0.0
          %368 = vmatprep.subr.mxu0 0.0
          %369 = vmatpush1.msra.mxu0 0.0
          %370 = vmatprep.subr.mxu0 0.0
          %371 = vmatpush1.msra.mxu0 0.0
          %372 = vmatprep.subr.mxu0 0.0
          %373 = vmatpush1.msra.mxu0 0.0
          %374 = vmatprep.subr.mxu0 0.0
          %375 = vmatpush1.msra.mxu0 0.0
          %376 = vmatprep.subr.mxu0 0.0
          %377 = vmatpush1.msra.mxu0 0.0
          %378 = vmatprep.subr.mxu0 0.0
          %379 = vmatpush1.msra.mxu0 0.0
          %380 = vmatprep.subr.mxu0 0.0
          %381 = vmatpush1.msra.mxu0 0.0
          %382 = vmatprep.subr.mxu0 0.0
          %383 = vmatpush1.msra.mxu0 0.0
          %384 = vmatprep.subr.mxu0 0.0
          %385 = vmatpush1.msra.mxu0 0.0
          %386 = vmatprep.subr.mxu0 0.0
          %387 = vmatpush1.msra.mxu0 0.0
          %388 = vmatprep.subr.mxu0 0.0
          %389 = vmatpush1.msra.mxu0 0.0
          %390 = vmatprep.subr.mxu0 0.0
          %391 = vmatpush1.msra.mxu0 0.0
          %392 = vmatprep.subr.mxu0 0.0
          %393 = vmatpush1.msra.mxu0 0.0
          %394 = vmatprep.subr.mxu0 0.0
          %395 = vmatpush1.msra.mxu0 0.0
          %396 = vmatprep.subr.mxu0 0.0
          %397 = vmatpush1.msra.mxu0 0.0
          %398 = vmatprep.subr.mxu0 0.0
          %399 = vmatpush1.msra.mxu0 0.0
          %400 = vmatprep.subr.mxu0 0.0
          %401 = vmatpush1.msra.mxu0 0.0
          %402 = vmatprep.subr.mxu0 0.0
          %403 = vmatpush1.msra.mxu0 0.0
          %404 = vmatprep.subr.mxu0 0.0
          %405 = vmatpush1.msra.mxu0 0.0
          %406 = vmatprep.subr.mxu0 0.0
          %407 = vmatpush1.msra.mxu0 0.0
          %408 = vmatprep.subr.mxu0 0.0
          %409 = vmatpush1.msra.mxu0 0.0
          %410 = vmatprep.subr.mxu0 0.0
          %411 = vmatpush1.msra.mxu0 0.0
          %412 = vmatprep.subr.mxu0 0.0
          %413 = vmatpush1.msra.mxu0 0.0
          %414 = vmatprep.subr.mxu0 0.0
          %415 = vmatpush1.msra.mxu0 0.0
          %416 = vmatprep.subr.mxu0 0.0
          %417 = vmatpush1.msra.mxu0 0.0
          %418 = vmatprep.subr.mxu0 0.0
          %419 = vmatpush1.msra.mxu0 0.0
          %420 = vmatprep.subr.mxu0 0.0
          %421 = vmatpush1.msra.mxu0 0.0
          %422 = vmatprep.mubr.f32.mxu0 0.0
          %423 = vmatmul.mubr.f32.gmra.mrb[0].mxu0 %v343
          %v424 = vpop.f32.mrb[0].mxu0
          %v425 = vadd.f32 0.0, %v424
          %v426 = vpop.f32.mrb[0].mxu0
          %427 = vmatprep.mubr.f32.mxu0 0.0
          %428 = vmatmul.mubr.f32.gmra.mrb[0].mxu0 %v346
          %v429 = vpop.f32.mrb[0].mxu0
          %v430 = vadd.f32 0.0, %v429
          %v431 = vpop.f32.mrb[0].mxu0
          %432 = vmatprep.mubr.f32.mxu0 0.0
          %433 = vmatmul.mubr.f32.gmra.mrb[0].mxu0 %v349
          %v434 = vpop.f32.mrb[0].mxu0
          %v435 = vadd.f32 0.0, %v434
          %v436 = vpop.f32.mrb[0].mxu0
          %437 = vmatprep.mubr.f32.mxu0 0.0
          %438 = vmatmul.mubr.f32.gmra.mrb[0].mxu0 %v352
          %v439 = vpop.f32.mrb[0].mxu0
          %v440 = vadd.f32 0.0, %v439
          %v441 = vpop.f32.mrb[0].mxu0
          %442 = vdwg.mxu0
          %v443 = vsub.f32 0.0, %v425
          %v444 = vsub.f32 0.0, %v430
          %v445 = vsub.f32 0.0, %v435
          %v446 = vsub.f32 0.0, %v440
          %v447 = vmul.f32 %v443, 1.442695
          %v448 = vpow.pop %v447
          %v449 = vmul.f32 %v444, 1.442695
          %v450 = vpow.pop %v449
          %v451 = vmul.f32 %v445, 1.442695
          %v452 = vpow.pop %v451
          %v453 = vmul.f32 %v446, 1.442695
          %v454 = vpow.pop %v453
          %v455 = vadd.f32 %v448, 1.0
          %v456 = vadd.f32 %v450, 1.0
          %v457 = vadd.f32 %v452, 1.0
          %v458 = vadd.f32 %v454, 1.0
          %v459 = vrcp.pop %v455
          %v460 = vmul.f32 1.0, %v459
          %v461 = vrcp.pop %v456
          %v462 = vmul.f32 1.0, %v461
          %v463 = vrcp.pop %v457
          %v464 = vmul.f32 1.0, %v463
          %v465 = vrcp.pop %v458
          %v466 = vmul.f32 1.0, %v465
          %467 = vst.msk [vmem:[%s207] sm:$0xff] %vm245, %v460
          %468 = vst.msk [vmem:[%s207 + $0x8] sm:$0xff] %vm245, %v462
          %469 = vst.msk [vmem:[%s207 + $0x10] sm:$0xff] %vm245, %v464
          %470 = vst.msk [vmem:[%s207 + $0x18] sm:$0xff] %vm245, %v466
        $region44: #{tpu_custom_call.1} parent=31 // pred_fallthru
          _
        %p471 = scmp.lt.s32.totalorder %s21, 1
        %s472 = scalar_select %p471, %s21, 1
        %s473 = smul.addr %s472, 4
        %s474 = smul.addr %s473, 8
        %s475 = scalar_lea.vmem %s3, %s474
        // Predicated region
        $region45: #{tpu_custom_call.1} parent=31 // pred_check
          %p476 = pneg %p117
        $region46: #{tpu_custom_call.1} parent=31 // pred_check_branch
          %478 = sbr.rel (%p476) target = $region48
        $region47: #{tpu_custom_call.1} parent=31 // pred_region
          _
        $region48: #{tpu_custom_call.1} parent=31 // pred_fallthru
          _
      $region32: #{tpu_custom_call.1} parent=5 // pred_fallthru
        _
      %p479 = scmp.le.s32.totalorder 2, %s12
      // Predicated region
      $region49: #{tpu_custom_call.1} parent=5 // pred_check
        %p480 = pneg %p479
      $region50: #{tpu_custom_call.1} parent=5 // pred_check_branch
        %482 = sbr.rel (%p480) target = $region52
      $region51: #{tpu_custom_call.1} parent=5 // pred_region
        %s483 = ssub.s32 %s12, 2
        // Predicated region
        $region53: #{tpu_custom_call.1} parent=51 // pred_check
          %p484 = pneg %p123
        $region54: #{tpu_custom_call.1} parent=51 // pred_check_branch
          %486 = sbr.rel (%p484) target = $region56
        $region55: #{tpu_custom_call.1} parent=51 // pred_region
          %p487 = scmp.lt.s32.totalorder %s23, 1
          %s488 = scalar_select %p487, %s23, 1
          %s489 = smul.addr %s488, 4
          %s490 = smul.addr %s489, 8
          %s491 = scalar_lea.vmem %s3, %s490
        $region56: #{tpu_custom_call.1} parent=51 // pred_fallthru
          _
      $region52: #{tpu_custom_call.1} parent=5 // pred_fallthru
        _
    $region6: #{tpu_custom_call.1} parent=1 // loop_footer
      %s16 = sadd.s32 1, %s12
    $region7: #{tpu_custom_call.1} parent=1 // loop_footer_branch
      %11 = sbr.rel target = $region3
    $region8: #{tpu_custom_call.1} parent=1 // loop_exit
      _
    %492 = vsyncpa [#allocation4], 1
    %s493 = scalar_lea.sflag [#allocation4], 1
    %494 = vsyncpa %s493, 1

</llo_original>
